<compile_context>
chip_gen: v6e
topology: v6e:2x2x1
jax: 0.10.0
libtpu: 0.0.40
codegen_flags: <defaults>
</compile_context>

<pallas_src>
import functools

import jax
import jax.numpy as jnp
from jax.experimental import pallas as pl
from jax.experimental.pallas import tpu as pltpu

GAMMA = 1.5
ALPHA = 0.25
LANES = 128
SUB_ROWS = 512            # strip-mine granularity inside a tile (256 KiB f32)


def _round_up(x, m):
    return ((x + m - 1) // m) * m


def _chip_params():
    """(row_tile, n_parallel_chunks) per TPU generation.

    row_tile keeps 2 inputs x 2 pipeline buffers inside the default scoped
    VMEM budget (v5e: 8 of 16 MiB; v6e/v7x: 16 of 32 MiB), so no
    vmem_limit_bytes override is needed. n_parallel_chunks is 2 only where
    there are 2 TensorCores per chip (v7x).
    """
    try:
        kind = jax.devices()[0].device_kind.lower()
    except Exception:
        kind = ""
    if "v7" in kind:
        return 8192, 2
    if "v6" in kind:
        return 8192, 1
    if "v5e" in kind or "v5 lite" in kind or "v5lite" in kind:
        return 4096, 1
    return 4096, 1        # conservative default (v4 / v5p / unknown)


def _pow_gamma(d, gamma):
    """d ** gamma (d >= 0) with trace-time specialization; exact at d == 0."""
    if gamma == 1.5:
        return d * jnp.sqrt(d)
    if gamma == 2.0:
        return d * d
    if gamma == 1.0:
        return d
    return jnp.where(d > 0.0,
                     jnp.exp(gamma * jnp.log(jnp.maximum(d, 1e-30))), 0.0)


def _qfocal_elem_loss(x, t, gamma, alpha, approx_reciprocal=False):
    """Per-element QFocal loss; shared by the kernel body and the JAX tail."""
    x = x.astype(jnp.float32)
    t = t.astype(jnp.float32)
    e = jnp.exp(-jnp.abs(x))                       # feeds both BCE and sigmoid
    bce = jnp.maximum(x, 0.0) - x * t + jnp.log1p(e)
    one_p_e = 1.0 + e
    if approx_reciprocal:
        # v7x knob: moves the divide's refinement off the VALU onto the EUP.
        inv = pl.reciprocal(one_p_e, approx=True)
    else:
        inv = 1.0 / one_p_e
    p = jnp.where(x >= 0.0, inv, e * inv)          # == sigmoid(x)
    alpha_factor = (1.0 - alpha) + t * (2.0 * alpha - 1.0)   # constants folded
    d = jnp.abs(t - p)
    return bce * alpha_factor * _pow_gamma(d, gamma)


def _qfocal_kernel(pred_ref, true_ref, out_ref, *, gamma, alpha, row_tile,
                   approx_reciprocal):
    i = pl.program_id(1)   # reduction step within this parallel chunk

    @pl.when(i == 0)
    def _init():
        out_ref[...] = jnp.zeros_like(out_ref)

    def _chunk(row0, nrows):
        x = pred_ref[pl.ds(row0, nrows), :]
        t = true_ref[pl.ds(row0, nrows), :]
        loss = _qfocal_elem_loss(x, t, gamma, alpha, approx_reciprocal)
        # VALU-only partial reduction into the resident (1, 8, 128) block;
        # the single cross-lane reduce happens once in the wrapper.
        out_ref[...] += loss.reshape(nrows // 8, 8, LANES).sum(axis=0)[None]

    # Strip-mine the tile so multi-MiB temporaries are never live at once.
    n_full = row_tile // SUB_ROWS
    rem_rows = row_tile % SUB_ROWS
    if n_full == 1:
        _chunk(0, SUB_ROWS)
    elif n_full > 1:
        @pl.loop(0, n_full)
        def _(s):
            _chunk(pl.multiple_of(s * SUB_ROWS, SUB_ROWS), SUB_ROWS)
    if rem_rows:
        _chunk(n_full * SUB_ROWS, rem_rows)


def _qfocal_block_sums(pred2d, true2d, num_tiles, row_tile, n_parallel, gamma,
                       alpha, approx_reciprocal):
    """Runs the kernel over the first num_tiles*row_tile rows of pred2d/true2d
    and returns the scalar float32 sum of the loss over those rows."""
    n_outer = n_parallel if (num_tiles % n_parallel == 0) else 1
    n_inner = num_tiles // n_outer

    kernel = functools.partial(
        _qfocal_kernel, gamma=float(gamma), alpha=float(alpha),
        row_tile=row_tile, approx_reciprocal=bool(approx_reciprocal))

    partials = pl.pallas_call(
        kernel,
        out_shape=jax.ShapeDtypeStruct((n_outer, 8, LANES), jnp.float32),
        grid_spec=pltpu.PrefetchScalarGridSpec(
            num_scalar_prefetch=0,
            grid=(n_outer, n_inner),
            in_specs=[
                pl.BlockSpec((row_tile, LANES), lambda o, i: (o * n_inner + i, 0)),
                pl.BlockSpec((row_tile, LANES), lambda o, i: (o * n_inner + i, 0)),
            ],
            out_specs=pl.BlockSpec((1, 8, LANES), lambda o, i: (o, 0, 0)),
        ),
        compiler_params=pltpu.CompilerParams(
            dimension_semantics=("parallel", "arbitrary")),
    )(pred2d, true2d)
    return jnp.sum(partials, dtype=jnp.float32)


def qfocal_loss(pred, true, gamma=GAMMA, alpha=ALPHA, reduction="mean",
                approx_reciprocal=False):
    """QFocalLoss wrapping BCEWithLogitsLoss; reduction 'mean' or 'sum'."""
    assert pred.shape == true.shape
    if reduction not in ("mean", "sum"):
        # TODO(synk): reduction='none' (per-element loss map) is not wired
        # through this sum-reducing kernel.
        raise NotImplementedError("reduction='none' is not supported")

    total = int(pred.size)
    if total == 0:
        return jnp.float32(jnp.nan) if reduction == "mean" else jnp.float32(0.0)

    pred_flat = pred.reshape(-1)
    true_flat = true.reshape(-1)
    # Keep bf16/f16 inputs unconverted (halves HBM traffic; kernel upcasts).
    # Only integer targets are promoted so the 0.5 pad value stays exact.
    if not jnp.issubdtype(true_flat.dtype, jnp.floating):
        true_flat = true_flat.astype(jnp.float32)

    chip_rows, n_parallel = _chip_params()
    rows = total // LANES
    rem = total - rows * LANES

    kernel_sum = jnp.float32(0.0)
    tail_sum = jnp.float32(0.0)

    if rem == 0 and rows >= 8:
        # Zero-copy path: lane-dense reshape is free; no jnp.pad, ever.
        row_tile = chip_rows if rows >= chip_rows else (rows // 8) * 8
        num_tiles = rows // row_tile
        main_rows = num_tiles * row_tile
        pred2d = pred_flat.reshape(rows, LANES)
        true2d = true_flat.reshape(rows, LANES)
        kernel_sum = _qfocal_block_sums(pred2d, true2d, num_tiles, row_tile,
                                        n_parallel, gamma, alpha,
                                        approx_reciprocal)
        if main_rows < rows:
            # Sub-tile row tail (< row_tile rows): tiny fused plain-JAX sum.
            tail_sum = jnp.sum(
                _qfocal_elem_loss(pred2d[main_rows:], true2d[main_rows:],
                                  gamma, alpha),
                dtype=jnp.float32)
    elif rows + (1 if rem else 0) >= 8:
        # Lane-ragged element count: a copy is unavoidable for a lane-dense
        # reshape, so pad minimally. Padding pred with 0.0 and true with 0.5
        # makes padded elements contribute exactly zero (mod_factor == 0), so
        # no in-kernel mask is needed.
        # TODO(synk): a manual-DMA (memory_space=pl.ANY) path could avoid this
        # full read+write of the inputs for very large, unaligned tensors.
        rows_needed = rows + 1                       # rem != 0 here
        row_tile = (chip_rows if rows_needed >= chip_rows
                    else _round_up(rows_needed, 8))
        num_tiles = pl.cdiv(rows_needed, row_tile)
        rows_padded = num_tiles * row_tile
        pad = rows_padded * LANES - total
        pred2d = jnp.pad(pred_flat, (0, pad)).reshape(rows_padded, LANES)
        true2d = jnp.pad(true_flat, (0, pad),
                         constant_values=0.5).reshape(rows_padded, LANES)
        kernel_sum = _qfocal_block_sums(pred2d, true2d, num_tiles, row_tile,
                                        n_parallel, gamma, alpha,
                                        approx_reciprocal)
    else:
        # Fewer elements than a single (8, 128) tile: plain JAX.
        kernel_sum = jnp.sum(
            _qfocal_elem_loss(pred_flat, true_flat, gamma, alpha),
            dtype=jnp.float32)

    total_sum = kernel_sum + tail_sum
    if reduction == "mean":
        return total_sum / jnp.float32(total)
    return total_sum


def qfocal_loss_ref(pred, true, gamma=GAMMA, alpha=ALPHA, reduction="mean"):
    x = pred.astype(jnp.float32)
    t = true.astype(jnp.float32)
    bce = jnp.maximum(x, 0.0) - x * t + jnp.log1p(jnp.exp(-jnp.abs(x)))
    p = jax.nn.sigmoid(x)
    af = t * alpha + (1.0 - t) * (1.0 - alpha)
    mf = jnp.abs(t - p) ** gamma
    loss = bce * af * mf
    return jnp.mean(loss) if reduction == "mean" else jnp.sum(loss)


if __name__ == "__main__":
    key = jax.random.PRNGKey(0)
    k1, k2, k3, k4, k5, k6 = jax.random.split(key, 6)

    # 1) NCHW logits/targets, 128-aligned count -> zero-copy kernel path.
    pred = jax.random.normal(k1, (2, 4, 16, 16), dtype=jnp.float32) * 2.0
    true = (jax.random.uniform(k2, (2, 4, 16, 16)) > 0.7).astype(jnp.float32)
    out = jax.block_until_ready(qfocal_loss(pred, true))
    ref = jax.block_until_ready(qfocal_loss_ref(pred, true))
    assert jnp.allclose(out, ref, rtol=1e-5, atol=1e-6), (out, ref)

    # 2) Non-multiple-of-128 element count -> minimal pad (pred=0 / true=0.5).
    pred_odd = jax.random.normal(k3, (2, 3, 13, 13), dtype=jnp.float32) * 2.0
    true_odd = (jax.random.uniform(k4, (2, 3, 13, 13)) > 0.7).astype(jnp.float32)
    out_odd = jax.block_until_ready(qfocal_loss(pred_odd, true_odd))
    ref_odd = jax.block_until_ready(qfocal_loss_ref(pred_odd, true_odd))
    assert jnp.allclose(out_odd, ref_odd, rtol=1e-5, atol=1e-6), (out_odd, ref_odd)

    # 3) Larger aligned case exercising the strip-mined (pl.loop) body + 'sum'.
    pred_big = jax.random.normal(k5, (4, 8, 32, 128), dtype=jnp.float32) * 2.0
    true_big = (jax.random.uniform(k6, (4, 8, 32, 128)) > 0.7).astype(jnp.float32)
    out_big = jax.block_until_ready(qfocal_loss(pred_big, true_big, reduction="sum"))
    ref_big = jax.block_until_ready(qfocal_loss_ref(pred_big, true_big, reduction="sum"))
    assert jnp.allclose(out_big, ref_big, rtol=1e-5, atol=1e-3), (out_big, ref_big)

    print("KERNEL_OK")
</pallas_src>

<mosaic_0001>
module attributes {stable_mosaic.version = 11 : i64} {
  func.func @_qfocal_kernel(%arg0: i32, %arg1: i32, %arg2: memref<16x128xf32, #tpu.memory_space<vmem>>, %arg3: memref<16x128xf32, #tpu.memory_space<vmem>>, %arg4: memref<1x8x128xf32, #tpu.memory_space<vmem>>) attributes {dimension_semantics = [#tpu.dimension_semantics<parallel>, #tpu.dimension_semantics<arbitrary>], iteration_bounds = array<i64: 1, 1>, scalar_prefetch = 0 : i64, scratch_operands = 0 : i64, tpu.core_type = #tpu.core_type<tc>, window_params = [{transform_indices = @transform_0, window_bounds = array<i64: 16, 128>}, {transform_indices = @transform_1, window_bounds = array<i64: 16, 128>}, {transform_indices = @transform_2, window_bounds = array<i64: 1, 8, 128>}]} {
    %c0_i32 = arith.constant 0 : i32
    %0 = arith.cmpi eq, %arg1, %c0_i32 : i32
    %1 = arith.extui %0 : i1 to i32
    %c0_i32_0 = arith.constant 0 : i32
    %2 = arith.cmpi ne, %1, %c0_i32_0 : i32
    scf.if %2 {
      %cst_17 = arith.constant 0.000000e+00 : f32
      %39 = vector.broadcast %cst_17 : f32 to vector<1x8x128xf32>
      %c0_18 = arith.constant 0 : index
      %c0_19 = arith.constant 0 : index
      %c0_20 = arith.constant 0 : index
      %40 = vector.load %arg4[%c0_18, %c0_19, %c0_20] : memref<1x8x128xf32, #tpu.memory_space<vmem>>, vector<1x8x128xf32>
      tpu.vector_store %arg4[%c0_18, %c0_19, %c0_20], %39 {strides = array<i32>} : memref<1x8x128xf32, #tpu.memory_space<vmem>>, vector<1x8x128xf32>,
    } else {
    }
    %c0 = arith.constant 0 : index
    %c0_1 = arith.constant 0 : index
    %3 = vector.load %arg2[%c0, %c0_1] : memref<16x128xf32, #tpu.memory_space<vmem>>, vector<16x128xf32>
    %c0_2 = arith.constant 0 : index
    %c0_3 = arith.constant 0 : index
    %4 = vector.load %arg3[%c0_2, %c0_3] : memref<16x128xf32, #tpu.memory_space<vmem>>, vector<16x128xf32>
    %5 = math.absf %3 : vector<16x128xf32>
    %cst = arith.constant 0.000000e+00 : f32
    %6 = vector.broadcast %cst : f32 to vector<16x128xf32>
    %7 = arith.subf %6, %5 : vector<16x128xf32>
    %8 = math.exp %7 : vector<16x128xf32>
    %cst_4 = arith.constant 0.000000e+00 : f32
    %9 = vector.broadcast %cst_4 : f32 to vector<16x128xf32>
    %10 = arith.maximumf %3, %9 : vector<16x128xf32>
    %11 = arith.mulf %3, %4 : vector<16x128xf32>
    %12 = arith.subf %10, %11 : vector<16x128xf32>
    %13 = math.log1p %8 : vector<16x128xf32>
    %14 = arith.addf %12, %13 : vector<16x128xf32>
    %cst_5 = arith.constant 1.000000e+00 : f32
    %15 = vector.broadcast %cst_5 : f32 to vector<16x128xf32>
    %16 = arith.addf %15, %8 : vector<16x128xf32>
    %cst_6 = arith.constant 1.000000e+00 : f32
    %17 = vector.broadcast %cst_6 : f32 to vector<16x128xf32>
    %18 = arith.divf %17, %16 : vector<16x128xf32>
    %cst_7 = arith.constant 0.000000e+00 : f32
    %19 = vector.broadcast %cst_7 : f32 to vector<16x128xf32>
    %20 = arith.cmpf oge, %3, %19 : vector<16x128xf32>
    %21 = arith.mulf %8, %18 : vector<16x128xf32>
    %22 = arith.select %20, %18, %21 : vector<16x128xi1>, vector<16x128xf32>
    %cst_8 = arith.constant -5.000000e-01 : f32
    %23 = vector.broadcast %cst_8 : f32 to vector<16x128xf32>
    %24 = arith.mulf %4, %23 : vector<16x128xf32>
    %cst_9 = arith.constant 7.500000e-01 : f32
    %25 = vector.broadcast %cst_9 : f32 to vector<16x128xf32>
    %26 = arith.addf %25, %24 : vector<16x128xf32>
    %27 = arith.subf %4, %22 : vector<16x128xf32>
    %28 = math.absf %27 : vector<16x128xf32>
    %29 = arith.mulf %14, %26 : vector<16x128xf32>
    %30 = math.sqrt %28 : vector<16x128xf32>
    %31 = arith.mulf %28, %30 : vector<16x128xf32>
    %32 = arith.mulf %29, %31 : vector<16x128xf32>
    %c0_10 = arith.constant 0 : index
    %c0_11 = arith.constant 0 : index
    %c0_12 = arith.constant 0 : index
    %33 = vector.load %arg4[%c0_10, %c0_11, %c0_12] : memref<1x8x128xf32, #tpu.memory_space<vmem>>, vector<1x8x128xf32>
    %34 = vector.shape_cast %32 : vector<16x128xf32> to vector<2x8x128xf32>
    %cst_13 = arith.constant dense<0.000000e+00> : vector<8x128xf32>
    %35 = vector.multi_reduction <add>, %34, %cst_13 [0] : vector<2x8x128xf32> to vector<8x128xf32>
    %36 = vector.shape_cast %35 : vector<8x128xf32> to vector<1x8x128xf32>
    %37 = arith.addf %33, %36 : vector<1x8x128xf32>
    %c0_14 = arith.constant 0 : index
    %c0_15 = arith.constant 0 : index
    %c0_16 = arith.constant 0 : index
    %38 = vector.load %arg4[%c0_14, %c0_15, %c0_16] : memref<1x8x128xf32, #tpu.memory_space<vmem>>, vector<1x8x128xf32>
    tpu.vector_store %arg4[%c0_14, %c0_15, %c0_16], %37 {strides = array<i32>} : memref<1x8x128xf32, #tpu.memory_space<vmem>>, vector<1x8x128xf32>,
    return
  }
  func.func @transform_0(%arg0: i32, %arg1: i32) -> (i32, i32) {
    %c1_i32 = arith.constant 1 : i32
    %0 = arith.muli %arg0, %c1_i32 : i32
    %1 = arith.addi %0, %arg1 : i32
    %c0_i32 = arith.constant 0 : i32
    %c0_i32_0 = arith.constant 0 : i32
    return %1, %c0_i32 : i32, i32
  }
  func.func @transform_1(%arg0: i32, %arg1: i32) -> (i32, i32) {
    %c1_i32 = arith.constant 1 : i32
    %0 = arith.muli %arg0, %c1_i32 : i32
    %1 = arith.addi %0, %arg1 : i32
    %c0_i32 = arith.constant 0 : i32
    %c0_i32_0 = arith.constant 0 : i32
    return %1, %c0_i32 : i32, i32
  }
  func.func @transform_2(%arg0: i32, %arg1: i32) -> (i32, i32, i32) {
    %c0_i32 = arith.constant 0 : i32
    %c0_i32_0 = arith.constant 0 : i32
    %c0_i32_1 = arith.constant 0 : i32
    return %arg0, %c0_i32, %c0_i32_0 : i32, i32, i32
  }
}

</mosaic_0001>

<llo_original>
// kernel: tpu_custom_call.1
$region0: #{tpu_custom_call.1}
  #allocation0 [shape = 'u32[]', space=smem, size = 0x4, offset = 0x4, fixed_abs, tag = 'smem constant byte address 0x4 - core index']
  #allocation1 [shape = 'u32[144,128]{1,0:T(1,128)}', space=vmem, size = 0x12000, scoped, tag = 'internal scratch']
  %s0 = inlined_call_operand.hbm [shape: f32[16,128], index: 0, kind: input, shape index: {}]
  %s1 = inlined_call_operand.hbm [shape: f32[16,128], index: 1, kind: input, shape index: {}]
  %s2 = inlined_call_operand.hbm [shape: f32[1,8,128], index: 2, kind: output, shape index: {}]
  %s3 = sld [smem:[#allocation0]]
  $region30: #{tpu_custom_call.1} parent=0
    _
  %s5 = ssub.s32 1, %s3
  %s6 = scalar_select 0, %s5, %s3
  $region1: #{tpu_custom_call.1} parent=0
    #allocation2 [shape = 'u8[8192]{0}', space=vmem, size = 0x2000, scoped, tag = 'input window, operand 0, single buffered']
    #allocation3 [shape = 's32[1]{0}', space=sflag, size = 0x4, scoped, tag = 'scoped memory for tpu_custom_call.1']
    #allocation4 [shape = 's32[1]{0}', space=sflag, size = 0x4, scoped, tag = 'scoped memory for tpu_custom_call.1']
    #allocation5 [shape = 'u8[8192]{0}', space=vmem, size = 0x2000, scoped, tag = 'input window, operand 1, single buffered']
    #allocation6 [shape = 's32[1]{0}', space=sflag, size = 0x4, scoped, tag = 'scoped memory for tpu_custom_call.1']
    #allocation7 [shape = 'u8[4096]{0}', space=vmem, size = 0x1000, scoped, tag = 'output window, operand 0, single buffered']
    %7 = vsyncpa [#allocation3], 0
    %8 = vsyncpa [#allocation6], 0
    %9 = vsyncpa [#allocation4], 0
    // Predicated region
    $region2: #{tpu_custom_call.1} parent=1 // pred_check
      _
    $region3: #{tpu_custom_call.1} parent=1 // pred_check_branch
      %11 = sbr.rel (0) target = $region5
    $region4: #{tpu_custom_call.1} parent=1 // pred_region
      %s12 = sadd.s32 0, 0
      %s13 = smul.u32 2, %s12
      %s15 = ssub.s32 256, 256
      %16 = vsyncadd [#allocation3], %s15
      %s17 = smul.addr %s13, 128
      %s18 = scalar_lea.hbm %s0, %s17
      %s19 = sshll.u32 [#allocation2], 4
      %s20 = int_to_ptr.vmem [resolvable:$true] %s19
      %25 = dma.hbm_to_vmem [thread:$0]  %s18, 256, %s20, [#allocation3], 128, 128, 8
    $region5: #{tpu_custom_call.1} parent=1 // pred_fallthru
      _
    // Predicated region
    $region6: #{tpu_custom_call.1} parent=1 // pred_check
      _
    $region7: #{tpu_custom_call.1} parent=1 // pred_check_branch
      %27 = sbr.rel (0) target = $region9
    $region8: #{tpu_custom_call.1} parent=1 // pred_region
      %s28 = sadd.s32 0, 0
      %s29 = smul.u32 2, %s28
      %s31 = ssub.s32 256, 256
      %32 = vsyncadd [#allocation6], %s31
      %s33 = smul.addr %s29, 128
      %s34 = scalar_lea.hbm %s1, %s33
      %s35 = sshll.u32 [#allocation5], 4
      %s36 = int_to_ptr.vmem [resolvable:$true] %s35
      %41 = dma.hbm_to_vmem [thread:$0]  %s34, 256, %s36, [#allocation6], 128, 128, 8
    $region9: #{tpu_custom_call.1} parent=1 // pred_fallthru
      _
    // Predicated region
    $region10: #{tpu_custom_call.1} parent=1 // pred_check
      _
    $region11: #{tpu_custom_call.1} parent=1 // pred_check_branch
      %43 = sbr.rel (0) target = $region13
    $region12: #{tpu_custom_call.1} parent=1 // pred_region
      %44 = dma.done [#allocation3], 256
    $region13: #{tpu_custom_call.1} parent=1 // pred_fallthru
      _
    // Predicated region
    $region14: #{tpu_custom_call.1} parent=1 // pred_check
      _
    $region15: #{tpu_custom_call.1} parent=1 // pred_check_branch
      %46 = sbr.rel (0) target = $region17
    $region16: #{tpu_custom_call.1} parent=1 // pred_region
      %47 = dma.done [#allocation6], 256
    $region17: #{tpu_custom_call.1} parent=1 // pred_fallthru
      _
    %s48 = sadd.s32 0, 0
    %s49 = smul.u32 2, %s48
    %s50 = sadd.s32 0, 0
    %s51 = smul.u32 2, %s50
    %p52 = scmp.eq.s32.totalorder 0, 0
    // Predicated region
    $region18: #{tpu_custom_call.1} parent=1 // pred_check
      %p53 = pneg %p52
    $region19: #{tpu_custom_call.1} parent=1 // pred_check_branch
      %55 = sbr.rel (%p53) target = $region21
    $region20: #{tpu_custom_call.1} parent=1 // pred_region
      %56 = vst [vmem:[#allocation7] sm:$0xff] 0.0
    $region21: #{tpu_custom_call.1} parent=1 // pred_fallthru
      _
    %v57 = vld [vmem:[#allocation2] sm:$0xff]
    %v58 = vld [vmem:[#allocation2 + $0x8] sm:$0xff]
    %v59 = vld [vmem:[#allocation5] sm:$0xff]
    %v60 = vld [vmem:[#allocation5 + $0x8] sm:$0xff]
    %v61 = vand.u32 2147483647, %v57
    %v62 = vand.u32 2147483647, %v58
    %v63 = vsub.f32 0.0, %v61
    %v64 = vsub.f32 0.0, %v62
    %v65 = vmul.f32 %v63, 1.442695
    %v66 = vpow.pop %v65
    %v67 = vmul.f32 %v64, 1.442695
    %v68 = vpow.pop %v67
    %v69 = vmax.f32 %v57, 0.0
    %v70 = vmax.f32 %v58, 0.0
    %v71 = vmul.f32 %v57, %v59
    %v72 = vmul.f32 %v58, %v60
    %v73 = vsub.f32 %v69, %v71
    %v74 = vsub.f32 %v70, %v72
    %v75 = vadd.f32 %v66, 1.0
    %v76 = vlog2.pop %v75
    %v77 = vmul.f32 %v76, 0.6931472
    %v78 = vmul.f32 -0.5, %v66
    %v79 = vadd.f32 %v78, 1.0
    %v80 = vmul.f32 %v79, %v66
    %v81 = vand.u32 2147483647, %v66
    %vm82 = vcmp.lt.f32.partialorder %v81, 0.0004427343
    %v83 = vsel %vm82, %v80, %v77
    %v84 = vadd.f32 %v68, 1.0
    %v85 = vlog2.pop %v84
    %v86 = vmul.f32 %v85, 0.6931472
    %v87 = vmul.f32 -0.5, %v68
    %v88 = vadd.f32 %v87, 1.0
    %v89 = vmul.f32 %v88, %v68
    %v90 = vand.u32 2147483647, %v68
    %vm91 = vcmp.lt.f32.partialorder %v90, 0.0004427343
    %v92 = vsel %vm91, %v89, %v86
    %v93 = vadd.f32 %v73, %v83
    %v94 = vadd.f32 %v74, %v92
    %v95 = vadd.f32 %v66, 1.0
    %v96 = vadd.f32 %v68, 1.0
    %v97 = vrcp.pop %v95
    %v98 = vmul.f32 1.0, %v97
    %v99 = vrcp.pop %v96
    %v100 = vmul.f32 1.0, %v99
    %vm101 = vcmp.ge.f32.partialorder %v57, 0.0
    %vm102 = vcmp.ge.f32.partialorder %v58, 0.0
    %v103 = vmul.f32 %v66, %v98
    %v104 = vmul.f32 %v68, %v100
    %v105 = vsel %vm101, %v98, %v103
    %v106 = vsel %vm102, %v100, %v104
    %v107 = vmul.f32 %v59, -0.5
    %v108 = vmul.f32 %v60, -0.5
    %v109 = vadd.f32 %v107, 0.75
    %v110 = vadd.f32 %v108, 0.75
    %v111 = vsub.f32 %v59, %v105
    %v112 = vsub.f32 %v60, %v106
    %v113 = vand.u32 2147483647, %v111
    %v114 = vand.u32 2147483647, %v112
    %v115 = vmul.f32 %v93, %v109
    %v116 = vmul.f32 %v94, %v110
    %v117 = vrsqrt.pop %v113
    %v118 = vmul.f32 %v113, %v117
    %vm119 = vcmp.eq.f32.partialorder %v113, inf
    %v120 = vsel %vm119, %v113, %v118
    %vm121 = vcmp.eq.f32.partialorder %v113, 0.0
    %v122 = vand.u32 %v113, 2147483648
    %v123 = vsel %vm121, %v122, %v120
    %v124 = vrsqrt.pop %v114
    %v125 = vmul.f32 %v114, %v124
    %vm126 = vcmp.eq.f32.partialorder %v114, inf
    %v127 = vsel %vm126, %v114, %v125
    %vm128 = vcmp.eq.f32.partialorder %v114, 0.0
    %v129 = vand.u32 %v114, 2147483648
    %v130 = vsel %vm128, %v129, %v127
    %v131 = vmul.f32 %v113, %v123
    %v132 = vmul.f32 %v114, %v130
    %v133 = vmul.f32 %v115, %v131
    %v134 = vmul.f32 %v116, %v132
    %v135 = vld [vmem:[#allocation7] sm:$0xff]
    %v136 = vadd.f32 %v133, %v134
    %v137 = vadd.f32 %v135, %v136
    %138 = vst [vmem:[#allocation7] sm:$0xff] %v137
    // Predicated region
    $region22: #{tpu_custom_call.1} parent=1 // pred_check
      _
    $region23: #{tpu_custom_call.1} parent=1 // pred_check_branch
      %140 = sbr.rel (0) target = $region25
    $region24: #{tpu_custom_call.1} parent=1 // pred_region
      %s142 = ssub.s32 128, 128
      %143 = vsyncadd [#allocation4], %s142
      %s145 = sshll.u32 [#allocation7], 4
      %s146 = int_to_ptr.vmem [resolvable:$true] %s145
      %148 = dma.vmem_to_hbm [thread:$0]  %s146, 128, %s2, [#allocation4]
    $region25: #{tpu_custom_call.1} parent=1 // pred_fallthru
      _
    // Predicated region
    $region26: #{tpu_custom_call.1} parent=1 // pred_check
      _
    $region27: #{tpu_custom_call.1} parent=1 // pred_check_branch
      %150 = sbr.rel (0) target = $region29
    $region28: #{tpu_custom_call.1} parent=1 // pred_region
      %151 = dma.done [#allocation4], 128
    $region29: #{tpu_custom_call.1} parent=1 // pred_fallthru
      _
    %152 = vsyncpa [#allocation3], 1
    %153 = vsyncpa [#allocation6], 1
    %154 = vsyncpa [#allocation4], 1

</llo_original>
